<compile_context>
chip_gen: v6e
topology: v6e:2x2x1
jax: 0.10.0
libtpu: 0.0.40
codegen_flags: <defaults>
</compile_context>

<pallas_src>
import functools

import jax
import jax.numpy as jnp
from jax.experimental import pallas as pl
from jax.experimental.pallas import tpu as pltpu


# ----------------------------------------------------------------------------
# Kernel
# ----------------------------------------------------------------------------
def _vae_kernel(x_ref, eps_ref,
                w1_ref, b1_ref,
                w2m_ref, b2m_ref, w2v_ref, b2v_ref,
                w3_ref, b3_ref, w4_ref, b4_ref,
                recon_ref, mu_ref, logvar_ref):
    """One batch-tile of the full VAE forward. Matmuls in bf16 -> f32 acc,
    elementwise math in f32. All feature dims are pre-padded to 128 lanes."""
    x = x_ref[...]                      # bf16 (tile_b, Dp)

    # ---- encoder: Linear -> ReLU -> Linear(mu) / Linear(logvar) ----
    h = jnp.dot(x, w1_ref[...], preferred_element_type=jnp.float32) + b1_ref[...]
    h = jnp.maximum(h, 0.0)
    h16 = h.astype(jnp.bfloat16)

    mu = jnp.dot(h16, w2m_ref[...], preferred_element_type=jnp.float32) + b2m_ref[...]
    logvar = jnp.dot(h16, w2v_ref[...], preferred_element_type=jnp.float32) + b2v_ref[...]

    # ---- reparameterize: z = mu + eps * exp(0.5 * logvar)  (f32) ----
    z = mu + eps_ref[...] * jnp.exp(0.5 * logvar)

    # ---- decoder: Linear -> ReLU -> Linear ----
    h2 = jnp.dot(z.astype(jnp.bfloat16), w3_ref[...],
                 preferred_element_type=jnp.float32) + b3_ref[...]
    h2 = jnp.maximum(h2, 0.0)
    recon = jnp.dot(h2.astype(jnp.bfloat16), w4_ref[...],
                    preferred_element_type=jnp.float32) + b4_ref[...]

    recon_ref[...] = recon
    mu_ref[...] = mu
    logvar_ref[...] = logvar


# ----------------------------------------------------------------------------
# Wrapper helpers
# ----------------------------------------------------------------------------
def _round_up(n, m):
    return ((n + m - 1) // m) * m


def _choose_tile_b(B):
    """Large batch tiles amortize the ~0.35us/grid-step overhead and fill the
    MXU (128 rows on v5e, 256 on v6e/v7x). Once B is large enough, keep >=2
    grid steps so the 'parallel' batch axis can be split across v7x's 2 TCs."""
    if B <= 256:
        return B                        # whole batch in one grid step
    for t in (512, 256, 128, 64, 32, 16, 8):
        if B % t == 0 and B // t >= 2:
            return t
    return B                            # fallback: single full-batch step


def _vmem_limit_bytes(tile_b, Dp, Hp, Lp):
    """Rough VMEM budget: double-buffered batch-tile I/O + resident weights
    + intermediate headroom.  Capped below v7x's 64 MiB physical VMEM."""
    bf16, f32 = 2, 4
    acts = 2 * tile_b * (Dp * bf16 + Lp * f32)            # x (bf16), eps (f32)
    outs = 2 * tile_b * (Dp + 2 * Lp) * f32               # recon, mu, logvar
    wts = 2 * ((Dp * Hp + 2 * Hp * Lp + Lp * Hp + Hp * Dp) * bf16
               + (2 * Hp + 2 * Lp + Dp) * f32)            # weights + biases
    inter = 4 * tile_b * max(Dp, Hp, Lp) * f32            # kernel intermediates
    est = acts + outs + wts + inter
    return int(min(max(2 * est, 16 * 1024 * 1024), 48 * 1024 * 1024))


# ----------------------------------------------------------------------------
# Forward
# ----------------------------------------------------------------------------
@functools.partial(jax.jit, static_argnames=("tile_b",))
def vae_forward(x, eps, params, *, tile_b=None):
    """Pallas VAE forward. x: (B, input_dim) f32, eps: (B, latent_dim) f32.
    params: (w1, b1, w2, b2, w3, b3, w4, b4) with weights as (in, out) f32."""
    B, input_dim = x.shape
    latent_dim = eps.shape[1]
    w1, b1, w2, b2, w3, b3, w4, b4 = params
    hidden_dim = w1.shape[1]
    assert w2.shape[1] == 2 * latent_dim

    # Pad feature dims to 128-lane multiples: unmasked loads/stores,
    # full-width MXU passes.  Zero padding keeps the math exact.
    Dp = _round_up(input_dim, 128)
    Hp = _round_up(hidden_dim, 128)
    Lp = _round_up(latent_dim, 128)

    def pad2(a, r, c):
        return jnp.pad(a, ((0, r - a.shape[0]), (0, c - a.shape[1])))

    # Split the second encoder layer into mu / logvar halves:
    # no in-kernel chunk, no cross-lane slicing.
    w2_mu, w2_lv = w2[:, :latent_dim], w2[:, latent_dim:]
    b2_mu, b2_lv = b2[:, :latent_dim], b2[:, latent_dim:]

    bf = jnp.bfloat16
    xw = pad2(x, B, Dp).astype(bf)
    epsw = pad2(eps, B, Lp)                                  # stays f32
    w1p = pad2(w1, Dp, Hp).astype(bf);    b1p = pad2(b1, 1, Hp)
    w2mp = pad2(w2_mu, Hp, Lp).astype(bf); b2mp = pad2(b2_mu, 1, Lp)
    w2vp = pad2(w2_lv, Hp, Lp).astype(bf); b2vp = pad2(b2_lv, 1, Lp)
    w3p = pad2(w3, Lp, Hp).astype(bf);    b3p = pad2(b3, 1, Hp)
    w4p = pad2(w4, Hp, Dp).astype(bf);    b4p = pad2(b4, 1, Dp)

    if tile_b is None:
        tile_b = _choose_tile_b(B)
    assert B % tile_b == 0
    grid = (B // tile_b,)

    def batch_spec(feat):
        return pl.BlockSpec((tile_b, feat), lambda i: (i, 0))

    def full_spec(shape):
        # Weights/biases: constant index_map -> fetched once, resident in VMEM.
        return pl.BlockSpec(shape, lambda i: (0,) * len(shape))

    in_specs = [
        batch_spec(Dp),                   # x
        batch_spec(Lp),                   # eps
        full_spec(w1p.shape), full_spec(b1p.shape),
        full_spec(w2mp.shape), full_spec(b2mp.shape),
        full_spec(w2vp.shape), full_spec(b2vp.shape),
        full_spec(w3p.shape), full_spec(b3p.shape),
        full_spec(w4p.shape), full_spec(b4p.shape),
    ]
    out_specs = [
        batch_spec(Dp),                   # recon (padded)
        batch_spec(Lp),                   # mu    (padded)
        batch_spec(Lp),                   # logvar(padded)
    ]
    out_shape = [
        jax.ShapeDtypeStruct((B, Dp), jnp.float32),
        jax.ShapeDtypeStruct((B, Lp), jnp.float32),
        jax.ShapeDtypeStruct((B, Lp), jnp.float32),
    ]

    recon_p, mu_p, logvar_p = pl.pallas_call(
        _vae_kernel,
        grid=grid,
        in_specs=in_specs,
        out_specs=out_specs,
        out_shape=out_shape,
        compiler_params=pltpu.CompilerParams(
            dimension_semantics=("parallel",),
            vmem_limit_bytes=_vmem_limit_bytes(tile_b, Dp, Hp, Lp)),
    )(xw, epsw, w1p, b1p, w2mp, b2mp, w2vp, b2vp, w3p, b3p, w4p, b4p)

    # Slice off the lane padding (outside the kernel; cheap XLA slices).
    return (recon_p[:, :input_dim],
            mu_p[:, :latent_dim],
            logvar_p[:, :latent_dim])


# ----------------------------------------------------------------------------
# Parameters / reference
# ----------------------------------------------------------------------------
def init_params(key, input_dim, hidden_dim, latent_dim):
    """Deterministic synthetic parameters, already transposed to (in, out)."""
    ks = jax.random.split(key, 8)

    def lin(kw, kb, fan_in, fan_out):
        scale = 1.0 / jnp.sqrt(fan_in)
        w = jax.random.uniform(kw, (fan_in, fan_out), jnp.float32, -scale, scale)
        b = jax.random.uniform(kb, (1, fan_out), jnp.float32, -scale, scale)
        return w, b

    w1, b1 = lin(ks[0], ks[1], input_dim, hidden_dim)
    w2, b2 = lin(ks[2], ks[3], hidden_dim, latent_dim * 2)
    w3, b3 = lin(ks[4], ks[5], latent_dim, hidden_dim)
    w4, b4 = lin(ks[6], ks[7], hidden_dim, input_dim)
    return (w1, b1, w2, b2, w3, b3, w4, b4)


def vae_reference(x, eps, params):
    """Pure-JAX f32 reference mirroring the PyTorch forward."""
    w1, b1, w2, b2, w3, b3, w4, b4 = params
    h = jnp.maximum(x @ w1 + b1, 0.0)
    mu_logvar = h @ w2 + b2
    latent_dim = eps.shape[1]
    mu, logvar = mu_logvar[:, :latent_dim], mu_logvar[:, latent_dim:]
    z = mu + eps * jnp.exp(0.5 * logvar)
    h2 = jnp.maximum(z @ w3 + b3, 0.0)
    recon = h2 @ w4 + b4
    return recon, mu, logvar


# ----------------------------------------------------------------------------
# Smoke test
# ----------------------------------------------------------------------------
if __name__ == "__main__":
    key = jax.random.PRNGKey(0)
    k_x, k_eps, k_p = jax.random.split(key, 3)

    B, INPUT_DIM, HIDDEN_DIM, LATENT_DIM = 64, 32, 64, 16

    x = jax.random.normal(k_x, (B, INPUT_DIM), jnp.float32)
    eps = jax.random.normal(k_eps, (B, LATENT_DIM), jnp.float32)
    params = init_params(k_p, INPUT_DIM, HIDDEN_DIM, LATENT_DIM)

    r_ref, mu_ref, lv_ref = vae_reference(x, eps, params)

    # bf16 matmul operands -> compare against the f32 reference with loose tol.
    TOL = dict(atol=5e-2, rtol=5e-2)

    # 1) default tiling: whole (small) batch in a single grid step.
    recon, mu, logvar = vae_forward(x, eps, params)
    jax.block_until_ready((recon, mu, logvar))
    assert jnp.allclose(recon, r_ref, **TOL)
    assert jnp.allclose(mu, mu_ref, **TOL)
    assert jnp.allclose(logvar, lv_ref, **TOL)

    # 2) explicit smaller tile: exercise the multi-step "parallel" grid path.
    recon2, mu2, logvar2 = vae_forward(x, eps, params, tile_b=32)
    jax.block_until_ready((recon2, mu2, logvar2))
    assert jnp.allclose(recon2, r_ref, **TOL)
    assert jnp.allclose(mu2, mu_ref, **TOL)
    assert jnp.allclose(logvar2, lv_ref, **TOL)

    print("KERNEL_OK")
</pallas_src>

<mosaic_0001>
module attributes {stable_mosaic.version = 11 : i64} {
  func.func @_vae_kernel(%arg0: i32, %arg1: memref<64x128xbf16, #tpu.memory_space<vmem>>, %arg2: memref<64x128xf32, #tpu.memory_space<vmem>>, %arg3: memref<128x128xbf16, #tpu.memory_space<vmem>>, %arg4: memref<1x128xf32, #tpu.memory_space<vmem>>, %arg5: memref<128x128xbf16, #tpu.memory_space<vmem>>, %arg6: memref<1x128xf32, #tpu.memory_space<vmem>>, %arg7: memref<128x128xbf16, #tpu.memory_space<vmem>>, %arg8: memref<1x128xf32, #tpu.memory_space<vmem>>, %arg9: memref<128x128xbf16, #tpu.memory_space<vmem>>, %arg10: memref<1x128xf32, #tpu.memory_space<vmem>>, %arg11: memref<128x128xbf16, #tpu.memory_space<vmem>>, %arg12: memref<1x128xf32, #tpu.memory_space<vmem>>, %arg13: memref<64x128xf32, #tpu.memory_space<vmem>>, %arg14: memref<64x128xf32, #tpu.memory_space<vmem>>, %arg15: memref<64x128xf32, #tpu.memory_space<vmem>>) attributes {dimension_semantics = [#tpu.dimension_semantics<parallel>], iteration_bounds = array<i64: 1>, scalar_prefetch = 0 : i64, scratch_operands = 0 : i64, tpu.core_type = #tpu.core_type<tc>, window_params = [{transform_indices = @transform_0, window_bounds = array<i64: 64, 128>}, {transform_indices = @transform_1, window_bounds = array<i64: 64, 128>}, {pipeline_mode = #tpu.pipeline_mode<synchronous>, transform_indices = @transform_2, window_bounds = array<i64: 128, 128>}, {pipeline_mode = #tpu.pipeline_mode<synchronous>, transform_indices = @transform_3, window_bounds = array<i64: 1, 128>}, {pipeline_mode = #tpu.pipeline_mode<synchronous>, transform_indices = @transform_4, window_bounds = array<i64: 128, 128>}, {pipeline_mode = #tpu.pipeline_mode<synchronous>, transform_indices = @transform_5, window_bounds = array<i64: 1, 128>}, {pipeline_mode = #tpu.pipeline_mode<synchronous>, transform_indices = @transform_6, window_bounds = array<i64: 128, 128>}, {pipeline_mode = #tpu.pipeline_mode<synchronous>, transform_indices = @transform_7, window_bounds = array<i64: 1, 128>}, {pipeline_mode = #tpu.pipeline_mode<synchronous>, transform_indices = @transform_8, window_bounds = array<i64: 128, 128>}, {pipeline_mode = #tpu.pipeline_mode<synchronous>, transform_indices = @transform_9, window_bounds = array<i64: 1, 128>}, {pipeline_mode = #tpu.pipeline_mode<synchronous>, transform_indices = @transform_10, window_bounds = array<i64: 128, 128>}, {pipeline_mode = #tpu.pipeline_mode<synchronous>, transform_indices = @transform_11, window_bounds = array<i64: 1, 128>}, {transform_indices = @transform_12, window_bounds = array<i64: 64, 128>}, {transform_indices = @transform_13, window_bounds = array<i64: 64, 128>}, {transform_indices = @transform_14, window_bounds = array<i64: 64, 128>}]} {
    %c0 = arith.constant 0 : index
    %c0_0 = arith.constant 0 : index
    %0 = vector.load %arg1[%c0, %c0_0] : memref<64x128xbf16, #tpu.memory_space<vmem>>, vector<64x128xbf16>
    %c0_1 = arith.constant 0 : index
    %c0_2 = arith.constant 0 : index
    %1 = vector.load %arg3[%c0_1, %c0_2] : memref<128x128xbf16, #tpu.memory_space<vmem>>, vector<128x128xbf16>
    %cst = arith.constant dense<0.000000e+00> : vector<64x128xf32>
    %2 = tpu.matmul %0, %1, %cst {dimension_numbers = #tpu.dot_dimension_numbers<[1], [0], [0], [1], [0, 0, 1, 1], [], []>} : vector<64x128xbf16>, vector<128x128xbf16>, vector<64x128xf32> -> vector<64x128xf32>
    %c0_3 = arith.constant 0 : index
    %c0_4 = arith.constant 0 : index
    %3 = vector.load %arg4[%c0_3, %c0_4] : memref<1x128xf32, #tpu.memory_space<vmem>>, vector<1x128xf32>
    %4 = vector.broadcast %3 : vector<1x128xf32> to vector<64x128xf32>
    %5 = arith.addf %2, %4 : vector<64x128xf32>
    %cst_5 = arith.constant 0.000000e+00 : f32
    %6 = vector.broadcast %cst_5 : f32 to vector<64x128xf32>
    %7 = arith.maximumf %5, %6 : vector<64x128xf32>
    %8 = arith.truncf %7 : vector<64x128xf32> to vector<64x128xbf16>
    %c0_6 = arith.constant 0 : index
    %c0_7 = arith.constant 0 : index
    %9 = vector.load %arg5[%c0_6, %c0_7] : memref<128x128xbf16, #tpu.memory_space<vmem>>, vector<128x128xbf16>
    %cst_8 = arith.constant dense<0.000000e+00> : vector<64x128xf32>
    %10 = tpu.matmul %8, %9, %cst_8 {dimension_numbers = #tpu.dot_dimension_numbers<[1], [0], [0], [1], [0, 0, 1, 1], [], []>} : vector<64x128xbf16>, vector<128x128xbf16>, vector<64x128xf32> -> vector<64x128xf32>
    %c0_9 = arith.constant 0 : index
    %c0_10 = arith.constant 0 : index
    %11 = vector.load %arg6[%c0_9, %c0_10] : memref<1x128xf32, #tpu.memory_space<vmem>>, vector<1x128xf32>
    %12 = vector.broadcast %11 : vector<1x128xf32> to vector<64x128xf32>
    %13 = arith.addf %10, %12 : vector<64x128xf32>
    %c0_11 = arith.constant 0 : index
    %c0_12 = arith.constant 0 : index
    %14 = vector.load %arg7[%c0_11, %c0_12] : memref<128x128xbf16, #tpu.memory_space<vmem>>, vector<128x128xbf16>
    %cst_13 = arith.constant dense<0.000000e+00> : vector<64x128xf32>
    %15 = tpu.matmul %8, %14, %cst_13 {dimension_numbers = #tpu.dot_dimension_numbers<[1], [0], [0], [1], [0, 0, 1, 1], [], []>} : vector<64x128xbf16>, vector<128x128xbf16>, vector<64x128xf32> -> vector<64x128xf32>
    %c0_14 = arith.constant 0 : index
    %c0_15 = arith.constant 0 : index
    %16 = vector.load %arg8[%c0_14, %c0_15] : memref<1x128xf32, #tpu.memory_space<vmem>>, vector<1x128xf32>
    %17 = vector.broadcast %16 : vector<1x128xf32> to vector<64x128xf32>
    %18 = arith.addf %15, %17 : vector<64x128xf32>
    %c0_16 = arith.constant 0 : index
    %c0_17 = arith.constant 0 : index
    %19 = vector.load %arg2[%c0_16, %c0_17] : memref<64x128xf32, #tpu.memory_space<vmem>>, vector<64x128xf32>
    %cst_18 = arith.constant 5.000000e-01 : f32
    %20 = vector.broadcast %cst_18 : f32 to vector<64x128xf32>
    %21 = arith.mulf %20, %18 : vector<64x128xf32>
    %22 = math.exp %21 : vector<64x128xf32>
    %23 = arith.mulf %19, %22 : vector<64x128xf32>
    %24 = arith.addf %13, %23 : vector<64x128xf32>
    %25 = arith.truncf %24 : vector<64x128xf32> to vector<64x128xbf16>
    %c0_19 = arith.constant 0 : index
    %c0_20 = arith.constant 0 : index
    %26 = vector.load %arg9[%c0_19, %c0_20] : memref<128x128xbf16, #tpu.memory_space<vmem>>, vector<128x128xbf16>
    %cst_21 = arith.constant dense<0.000000e+00> : vector<64x128xf32>
    %27 = tpu.matmul %25, %26, %cst_21 {dimension_numbers = #tpu.dot_dimension_numbers<[1], [0], [0], [1], [0, 0, 1, 1], [], []>} : vector<64x128xbf16>, vector<128x128xbf16>, vector<64x128xf32> -> vector<64x128xf32>
    %c0_22 = arith.constant 0 : index
    %c0_23 = arith.constant 0 : index
    %28 = vector.load %arg10[%c0_22, %c0_23] : memref<1x128xf32, #tpu.memory_space<vmem>>, vector<1x128xf32>
    %29 = vector.broadcast %28 : vector<1x128xf32> to vector<64x128xf32>
    %30 = arith.addf %27, %29 : vector<64x128xf32>
    %cst_24 = arith.constant 0.000000e+00 : f32
    %31 = vector.broadcast %cst_24 : f32 to vector<64x128xf32>
    %32 = arith.maximumf %30, %31 : vector<64x128xf32>
    %33 = arith.truncf %32 : vector<64x128xf32> to vector<64x128xbf16>
    %c0_25 = arith.constant 0 : index
    %c0_26 = arith.constant 0 : index
    %34 = vector.load %arg11[%c0_25, %c0_26] : memref<128x128xbf16, #tpu.memory_space<vmem>>, vector<128x128xbf16>
    %cst_27 = arith.constant dense<0.000000e+00> : vector<64x128xf32>
    %35 = tpu.matmul %33, %34, %cst_27 {dimension_numbers = #tpu.dot_dimension_numbers<[1], [0], [0], [1], [0, 0, 1, 1], [], []>} : vector<64x128xbf16>, vector<128x128xbf16>, vector<64x128xf32> -> vector<64x128xf32>
    %c0_28 = arith.constant 0 : index
    %c0_29 = arith.constant 0 : index
    %36 = vector.load %arg12[%c0_28, %c0_29] : memref<1x128xf32, #tpu.memory_space<vmem>>, vector<1x128xf32>
    %37 = vector.broadcast %36 : vector<1x128xf32> to vector<64x128xf32>
    %38 = arith.addf %35, %37 : vector<64x128xf32>
    %c0_30 = arith.constant 0 : index
    %c0_31 = arith.constant 0 : index
    %39 = vector.load %arg13[%c0_30, %c0_31] : memref<64x128xf32, #tpu.memory_space<vmem>>, vector<64x128xf32>
    tpu.vector_store %arg13[%c0_30, %c0_31], %38 {strides = array<i32>} : memref<64x128xf32, #tpu.memory_space<vmem>>, vector<64x128xf32>,
    %c0_32 = arith.constant 0 : index
    %c0_33 = arith.constant 0 : index
    %40 = vector.load %arg14[%c0_32, %c0_33] : memref<64x128xf32, #tpu.memory_space<vmem>>, vector<64x128xf32>
    tpu.vector_store %arg14[%c0_32, %c0_33], %13 {strides = array<i32>} : memref<64x128xf32, #tpu.memory_space<vmem>>, vector<64x128xf32>,
    %c0_34 = arith.constant 0 : index
    %c0_35 = arith.constant 0 : index
    %41 = vector.load %arg15[%c0_34, %c0_35] : memref<64x128xf32, #tpu.memory_space<vmem>>, vector<64x128xf32>
    tpu.vector_store %arg15[%c0_34, %c0_35], %18 {strides = array<i32>} : memref<64x128xf32, #tpu.memory_space<vmem>>, vector<64x128xf32>,
    return
  }
  func.func @transform_0(%arg0: i32) -> (i32, i32) {
    %c0_i32 = arith.constant 0 : i32
    %c0_i32_0 = arith.constant 0 : i32
    return %arg0, %c0_i32 : i32, i32
  }
  func.func @transform_1(%arg0: i32) -> (i32, i32) {
    %c0_i32 = arith.constant 0 : i32
    %c0_i32_0 = arith.constant 0 : i32
    return %arg0, %c0_i32 : i32, i32
  }
  func.func @transform_2(%arg0: i32) -> (i32, i32) {
    %c0_i32 = arith.constant 0 : i32
    %c0_i32_0 = arith.constant 0 : i32
    %c0_i32_1 = arith.constant 0 : i32
    return %c0_i32, %c0_i32_0 : i32, i32
  }
  func.func @transform_3(%arg0: i32) -> (i32, i32) {
    %c0_i32 = arith.constant 0 : i32
    %c0_i32_0 = arith.constant 0 : i32
    %c0_i32_1 = arith.constant 0 : i32
    return %c0_i32, %c0_i32_0 : i32, i32
  }
  func.func @transform_4(%arg0: i32) -> (i32, i32) {
    %c0_i32 = arith.constant 0 : i32
    %c0_i32_0 = arith.constant 0 : i32
    %c0_i32_1 = arith.constant 0 : i32
    return %c0_i32, %c0_i32_0 : i32, i32
  }
  func.func @transform_5(%arg0: i32) -> (i32, i32) {
    %c0_i32 = arith.constant 0 : i32
    %c0_i32_0 = arith.constant 0 : i32
    %c0_i32_1 = arith.constant 0 : i32
    return %c0_i32, %c0_i32_0 : i32, i32
  }
  func.func @transform_6(%arg0: i32) -> (i32, i32) {
    %c0_i32 = arith.constant 0 : i32
    %c0_i32_0 = arith.constant 0 : i32
    %c0_i32_1 = arith.constant 0 : i32
    return %c0_i32, %c0_i32_0 : i32, i32
  }
  func.func @transform_7(%arg0: i32) -> (i32, i32) {
    %c0_i32 = arith.constant 0 : i32
    %c0_i32_0 = arith.constant 0 : i32
    %c0_i32_1 = arith.constant 0 : i32
    return %c0_i32, %c0_i32_0 : i32, i32
  }
  func.func @transform_8(%arg0: i32) -> (i32, i32) {
    %c0_i32 = arith.constant 0 : i32
    %c0_i32_0 = arith.constant 0 : i32
    %c0_i32_1 = arith.constant 0 : i32
    return %c0_i32, %c0_i32_0 : i32, i32
  }
  func.func @transform_9(%arg0: i32) -> (i32, i32) {
    %c0_i32 = arith.constant 0 : i32
    %c0_i32_0 = arith.constant 0 : i32
    %c0_i32_1 = arith.constant 0 : i32
    return %c0_i32, %c0_i32_0 : i32, i32
  }
  func.func @transform_10(%arg0: i32) -> (i32, i32) {
    %c0_i32 = arith.constant 0 : i32
    %c0_i32_0 = arith.constant 0 : i32
    %c0_i32_1 = arith.constant 0 : i32
    return %c0_i32, %c0_i32_0 : i32, i32
  }
  func.func @transform_11(%arg0: i32) -> (i32, i32) {
    %c0_i32 = arith.constant 0 : i32
    %c0_i32_0 = arith.constant 0 : i32
    %c0_i32_1 = arith.constant 0 : i32
    return %c0_i32, %c0_i32_0 : i32, i32
  }
  func.func @transform_12(%arg0: i32) -> (i32, i32) {
    %c0_i32 = arith.constant 0 : i32
    %c0_i32_0 = arith.constant 0 : i32
    return %arg0, %c0_i32 : i32, i32
  }
  func.func @transform_13(%arg0: i32) -> (i32, i32) {
    %c0_i32 = arith.constant 0 : i32
    %c0_i32_0 = arith.constant 0 : i32
    return %arg0, %c0_i32 : i32, i32
  }
  func.func @transform_14(%arg0: i32) -> (i32, i32) {
    %c0_i32 = arith.constant 0 : i32
    %c0_i32_0 = arith.constant 0 : i32
    return %arg0, %c0_i32 : i32, i32
  }
}

</mosaic_0001>

<llo_original>
// kernel: vae_forward.1
$region0: #{vae_forward.1}
  #allocation0 [shape = 'u32[]', space=smem, size = 0x4, offset = 0x4, fixed_abs, tag = 'smem constant byte address 0x4 - core index']
  #allocation1 [shape = 'u32[144,128]{1,0:T(1,128)}', space=vmem, size = 0x12000, scoped, tag = 'internal scratch']
  %s0 = inlined_call_operand.vmem [shape: bf16[64,128], index: 0, kind: input, shape index: {}]
  %s1 = inlined_call_operand.vmem [shape: f32[64,128], index: 1, kind: input, shape index: {}]
  %s2 = inlined_call_operand.vmem [shape: bf16[128,128], index: 2, kind: input, shape index: {}]
  %s3 = inlined_call_operand.vmem [shape: f32[1,128], index: 3, kind: input, shape index: {}]
  %s4 = inlined_call_operand.vmem [shape: bf16[128,128], index: 4, kind: input, shape index: {}]
  %s5 = inlined_call_operand.vmem [shape: f32[1,128], index: 5, kind: input, shape index: {}]
  %s6 = inlined_call_operand.vmem [shape: bf16[128,128], index: 6, kind: input, shape index: {}]
  %s7 = inlined_call_operand.vmem [shape: f32[1,128], index: 7, kind: input, shape index: {}]
  %s8 = inlined_call_operand.vmem [shape: bf16[128,128], index: 8, kind: input, shape index: {}]
  %s9 = inlined_call_operand.vmem [shape: f32[1,128], index: 9, kind: input, shape index: {}]
  %s10 = inlined_call_operand.vmem [shape: bf16[128,128], index: 10, kind: input, shape index: {}]
  %s11 = inlined_call_operand.vmem [shape: f32[1,128], index: 11, kind: input, shape index: {}]
  %s12 = inlined_call_operand.vmem [shape: f32[64,128], index: 12, kind: output, shape index: {0}]
  %s13 = inlined_call_operand.vmem [shape: f32[64,128], index: 13, kind: output, shape index: {1}]
  %s14 = inlined_call_operand.vmem [shape: f32[64,128], index: 14, kind: output, shape index: {2}]
  %15 = xla_tuple %s12, %s13, %s14
  %s16 = sld [smem:[#allocation0]]
  $region74: #{vae_forward.1} parent=0
    _
  %s18 = ssub.s32 1, %s16
  %s19 = scalar_select 0, %s18, %s16
  // Predicated region
  $region2: #{vae_forward.1} parent=0 // pred_check
    _
  $region3: #{vae_forward.1} parent=0 // pred_check_branch
    %21 = sbr.rel (0) target = $region5
  $region4: #{vae_forward.1} parent=0 // pred_region
    _
  $region5: #{vae_forward.1} parent=0 // pred_fallthru
    _
  // Predicated region
  $region6: #{vae_forward.1} parent=0 // pred_check
    _
  $region7: #{vae_forward.1} parent=0 // pred_check_branch
    %23 = sbr.rel (0) target = $region9
  $region8: #{vae_forward.1} parent=0 // pred_region
    _
  $region9: #{vae_forward.1} parent=0 // pred_fallthru
    _
  // Predicated region
  $region10: #{vae_forward.1} parent=0 // pred_check
    _
  $region11: #{vae_forward.1} parent=0 // pred_check_branch
    %25 = sbr.rel (0) target = $region13
  $region12: #{vae_forward.1} parent=0 // pred_region
    _
  $region13: #{vae_forward.1} parent=0 // pred_fallthru
    _
  // Predicated region
  $region14: #{vae_forward.1} parent=0 // pred_check
    _
  $region15: #{vae_forward.1} parent=0 // pred_check_branch
    %27 = sbr.rel (0) target = $region17
  $region16: #{vae_forward.1} parent=0 // pred_region
    _
  $region17: #{vae_forward.1} parent=0 // pred_fallthru
    _
  // Predicated region
  $region18: #{vae_forward.1} parent=0 // pred_check
    _
  $region19: #{vae_forward.1} parent=0 // pred_check_branch
    %29 = sbr.rel (0) target = $region21
  $region20: #{vae_forward.1} parent=0 // pred_region
    _
  $region21: #{vae_forward.1} parent=0 // pred_fallthru
    _
  // Predicated region
  $region22: #{vae_forward.1} parent=0 // pred_check
    _
  $region23: #{vae_forward.1} parent=0 // pred_check_branch
    %31 = sbr.rel (0) target = $region25
  $region24: #{vae_forward.1} parent=0 // pred_region
    _
  $region25: #{vae_forward.1} parent=0 // pred_fallthru
    _
  // Predicated region
  $region26: #{vae_forward.1} parent=0 // pred_check
    _
  $region27: #{vae_forward.1} parent=0 // pred_check_branch
    %33 = sbr.rel (0) target = $region29
  $region28: #{vae_forward.1} parent=0 // pred_region
    _
  $region29: #{vae_forward.1} parent=0 // pred_fallthru
    _
  // Predicated region
  $region30: #{vae_forward.1} parent=0 // pred_check
    _
  $region31: #{vae_forward.1} parent=0 // pred_check_branch
    %35 = sbr.rel (0) target = $region33
  $region32: #{vae_forward.1} parent=0 // pred_region
    _
  $region33: #{vae_forward.1} parent=0 // pred_fallthru
    _
  // Predicated region
  $region34: #{vae_forward.1} parent=0 // pred_check
    _
  $region35: #{vae_forward.1} parent=0 // pred_check_branch
    %37 = sbr.rel (0) target = $region37
  $region36: #{vae_forward.1} parent=0 // pred_region
    _
  $region37: #{vae_forward.1} parent=0 // pred_fallthru
    _
  // Predicated region
  $region38: #{vae_forward.1} parent=0 // pred_check
    _
  $region39: #{vae_forward.1} parent=0 // pred_check_branch
    %39 = sbr.rel (0) target = $region41
  $region40: #{vae_forward.1} parent=0 // pred_region
    _
  $region41: #{vae_forward.1} parent=0 // pred_fallthru
    _
  // Predicated region
  $region42: #{vae_forward.1} parent=0 // pred_check
    _
  $region43: #{vae_forward.1} parent=0 // pred_check_branch
    %41 = sbr.rel (0) target = $region45
  $region44: #{vae_forward.1} parent=0 // pred_region
    _
  $region45: #{vae_forward.1} parent=0 // pred_fallthru
    _
  // Predicated region
  $region46: #{vae_forward.1} parent=0 // pred_check
    _
  $region47: #{vae_forward.1} parent=0 // pred_check_branch
    %43 = sbr.rel (0) target = $region49
  $region48: #{vae_forward.1} parent=0 // pred_region
    _
  $region49: #{vae_forward.1} parent=0 // pred_fallthru
    _
  %v45 = vld [vmem:[%s0] sm:$0xf]
  %v46 = vld [vmem:[%s0 + $0x4] sm:$0xf]
  %v47 = vld [vmem:[%s0 + $0x8] sm:$0xf]
  %v48 = vld [vmem:[%s0 + $0xc] sm:$0xf]
  %v49 = vld [vmem:[%s0 + $0x10] sm:$0xf]
  %v50 = vld [vmem:[%s0 + $0x14] sm:$0xf]
  %v51 = vld [vmem:[%s0 + $0x18] sm:$0xf]
  %v52 = vld [vmem:[%s0 + $0x1c] sm:$0xf]
  %v53 = vld [vmem:[%s2] sm:$0xf]
  %v54 = vld [vmem:[%s2 + $0x4] sm:$0xf]
  %v55 = vld [vmem:[%s2 + $0x8] sm:$0xf]
  %v56 = vld [vmem:[%s2 + $0xc] sm:$0xf]
  %v57 = vld [vmem:[%s2 + $0x10] sm:$0xf]
  %v58 = vld [vmem:[%s2 + $0x14] sm:$0xf]
  %v59 = vld [vmem:[%s2 + $0x18] sm:$0xf]
  %v60 = vld [vmem:[%s2 + $0x1c] sm:$0xf]
  %v61 = vld [vmem:[%s2 + $0x20] sm:$0xf]
  %v62 = vld [vmem:[%s2 + $0x24] sm:$0xf]
  %v63 = vld [vmem:[%s2 + $0x28] sm:$0xf]
  %v64 = vld [vmem:[%s2 + $0x2c] sm:$0xf]
  %v65 = vld [vmem:[%s2 + $0x30] sm:$0xf]
  %v66 = vld [vmem:[%s2 + $0x34] sm:$0xf]
  %v67 = vld [vmem:[%s2 + $0x38] sm:$0xf]
  %v68 = vld [vmem:[%s2 + $0x3c] sm:$0xf]
  %v69 = vld [vmem:[%s3] sm:$0x1]
  %v71 = vlaneseq
  %v72 = vshrl.u32 %v71, 7
  %v73 = vsub.s32 0, %v72
  %v74 = vrot.slane %v69, %v73
  %v84 = vunpack.c.l.b16 %v45
  %v85 = vunpack.c.l.b16 %v46
  %v86 = vunpack.c.l.b16 %v47
  %v87 = vunpack.c.l.b16 %v48
  %v88 = vunpack.c.l.b16 %v49
  %v89 = vunpack.c.l.b16 %v50
  %v90 = vunpack.c.l.b16 %v51
  %v91 = vunpack.c.l.b16 %v52
  %v92 = vpack.c.b16 %v85, %v84
  %v93 = vpack.c.b16 %v87, %v86
  %v94 = vpack.c.b16 %v89, %v88
  %v95 = vpack.c.b16 %v91, %v90
  %v116 = vunpack.c.l.b16 %v53
  %v117 = vunpack.c.l.b16 %v54
  %v118 = vunpack.c.l.b16 %v55
  %v119 = vunpack.c.l.b16 %v56
  %v120 = vunpack.c.l.b16 %v57
  %v121 = vunpack.c.l.b16 %v58
  %v122 = vunpack.c.l.b16 %v59
  %v123 = vunpack.c.l.b16 %v60
  %v124 = vunpack.c.l.b16 %v61
  %v125 = vunpack.c.l.b16 %v62
  %v126 = vunpack.c.l.b16 %v63
  %v127 = vunpack.c.l.b16 %v64
  %v128 = vunpack.c.l.b16 %v65
  %v129 = vunpack.c.l.b16 %v66
  %v130 = vunpack.c.l.b16 %v67
  %v131 = vunpack.c.l.b16 %v68
  %v132 = vpack.c.b16 %v117, %v116
  %v133 = vpack.c.b16 %v119, %v118
  %v134 = vpack.c.b16 %v121, %v120
  %v135 = vpack.c.b16 %v123, %v122
  %v136 = vpack.c.b16 %v125, %v124
  %v137 = vpack.c.b16 %v127, %v126
  %v138 = vpack.c.b16 %v129, %v128
  %v139 = vpack.c.b16 %v131, %v130
  %148 = vmatprep.subr.bf16.mxu0 0
  %149 = vmatpush1.bf16.msra.mxu0 %v139
  %150 = vmatprep.subr.bf16.mxu0 0
  %151 = vmatpush1.bf16.msra.mxu0 %v138
  %152 = vmatprep.subr.bf16.mxu0 0
  %153 = vmatpush1.bf16.msra.mxu0 %v137
  %154 = vmatprep.subr.bf16.mxu0 0
  %155 = vmatpush1.bf16.msra.mxu0 %v136
  %156 = vmatprep.subr.bf16.mxu0 0
  %157 = vmatpush1.bf16.msra.mxu0 %v135
  %158 = vmatprep.subr.bf16.mxu0 0
  %159 = vmatpush1.bf16.msra.mxu0 %v134
  %160 = vmatprep.subr.bf16.mxu0 0
  %161 = vmatpush1.bf16.msra.mxu0 %v133
  %162 = vmatprep.subr.bf16.mxu0 0
  %163 = vmatpush1.bf16.msra.mxu0 %v132
  %164 = vmatprep.subr.bf16.mxu0 0
  %165 = vmatpush2.bf16.msra.mxu0 0
  %166 = vmatprep.subr.bf16.mxu0 0
  %167 = vmatpush2.bf16.msra.mxu0 0
  %168 = vmatprep.subr.bf16.mxu0 0
  %169 = vmatpush2.bf16.msra.mxu0 0
  %170 = vmatprep.subr.bf16.mxu0 0
  %171 = vmatpush2.bf16.msra.mxu0 0
  %172 = vmatprep.subr.bf16.mxu0 0
  %173 = vmatpush2.bf16.msra.mxu0 0
  %174 = vmatprep.subr.bf16.mxu0 0
  %175 = vmatpush2.bf16.msra.mxu0 0
  %176 = vmatprep.subr.bf16.mxu0 0
  %177 = vmatpush2.bf16.msra.mxu0 0
  %178 = vmatprep.subr.bf16.mxu0 0
  %179 = vmatpush2.bf16.msra.mxu0 0
  %180 = vmatprep.mubr.bf16.mxu0 0
  %181 = vmatmul.mubr.bf16.gmra.mxu0 %v92
  %v182 = vpop.f32.mrf.mxu0
  %v183 = vadd.f32 %v74, %v182
  %v184 = vpop.f32.mrf.mxu0
  %v185 = vpop.f32.mrf.mxu0
  %v186 = vadd.f32 %v74, %v185
  %v187 = vpop.f32.mrf.mxu0
  %188 = vmatprep.mubr.bf16.mxu0 0
  %189 = vmatmul.mubr.bf16.gmra.mxu0 %v93
  %v190 = vpop.f32.mrf.mxu0
  %v191 = vadd.f32 %v74, %v190
  %v192 = vpop.f32.mrf.mxu0
  %v193 = vpop.f32.mrf.mxu0
  %v194 = vadd.f32 %v74, %v193
  %v195 = vpop.f32.mrf.mxu0
  %196 = vmatprep.mubr.bf16.mxu0 0
  %197 = vmatmul.mubr.bf16.gmra.mxu0 %v94
  %v198 = vpop.f32.mrf.mxu0
  %v199 = vadd.f32 %v74, %v198
  %v200 = vpop.f32.mrf.mxu0
  %v201 = vpop.f32.mrf.mxu0
  %v202 = vadd.f32 %v74, %v201
  %v203 = vpop.f32.mrf.mxu0
  %204 = vmatprep.mubr.bf16.mxu0 0
  %205 = vmatmul.mubr.bf16.gmra.mxu0 %v95
  %v206 = vpop.f32.mrf.mxu0
  %v207 = vadd.f32 %v74, %v206
  %v208 = vpop.f32.mrf.mxu0
  %v209 = vpop.f32.mrf.mxu0
  %v210 = vadd.f32 %v74, %v209
  %v211 = vpop.f32.mrf.mxu0
  %212 = vdwg.mxu0
  %v213 = vmax.f32 %v183, 0.0
  %v214 = vmax.f32 %v186, 0.0
  %v215 = vmax.f32 %v191, 0.0
  %v216 = vmax.f32 %v194, 0.0
  %v217 = vmax.f32 %v199, 0.0
  %v218 = vmax.f32 %v202, 0.0
  %v219 = vmax.f32 %v207, 0.0
  %v220 = vmax.f32 %v210, 0.0
  %v221 = vpack.c.bf16 %v214, %v213
  %v222 = vpack.c.bf16 %v216, %v215
  %v223 = vpack.c.bf16 %v218, %v217
  %v224 = vpack.c.bf16 %v220, %v219
  %v225 = vld [vmem:[%s4] sm:$0xf]
  %v226 = vld [vmem:[%s4 + $0x4] sm:$0xf]
  %v227 = vld [vmem:[%s4 + $0x8] sm:$0xf]
  %v228 = vld [vmem:[%s4 + $0xc] sm:$0xf]
  %v229 = vld [vmem:[%s4 + $0x10] sm:$0xf]
  %v230 = vld [vmem:[%s4 + $0x14] sm:$0xf]
  %v231 = vld [vmem:[%s4 + $0x18] sm:$0xf]
  %v232 = vld [vmem:[%s4 + $0x1c] sm:$0xf]
  %v233 = vld [vmem:[%s4 + $0x20] sm:$0xf]
  %v234 = vld [vmem:[%s4 + $0x24] sm:$0xf]
  %v235 = vld [vmem:[%s4 + $0x28] sm:$0xf]
  %v236 = vld [vmem:[%s4 + $0x2c] sm:$0xf]
  %v237 = vld [vmem:[%s4 + $0x30] sm:$0xf]
  %v238 = vld [vmem:[%s4 + $0x34] sm:$0xf]
  %v239 = vld [vmem:[%s4 + $0x38] sm:$0xf]
  %v240 = vld [vmem:[%s4 + $0x3c] sm:$0xf]
  %v241 = vld [vmem:[%s5] sm:$0x1]
  %v243 = vlaneseq
  %v244 = vshrl.u32 %v243, 7
  %v245 = vsub.s32 0, %v244
  %v246 = vrot.slane %v241, %v245
  %v264 = vunpack.c.l.b16 %v225
  %v265 = vunpack.c.l.b16 %v226
  %v266 = vunpack.c.l.b16 %v227
  %v267 = vunpack.c.l.b16 %v228
  %v268 = vunpack.c.l.b16 %v229
  %v269 = vunpack.c.l.b16 %v230
  %v270 = vunpack.c.l.b16 %v231
  %v271 = vunpack.c.l.b16 %v232
  %v272 = vunpack.c.l.b16 %v233
  %v273 = vunpack.c.l.b16 %v234
  %v274 = vunpack.c.l.b16 %v235
  %v275 = vunpack.c.l.b16 %v236
  %v276 = vunpack.c.l.b16 %v237
  %v277 = vunpack.c.l.b16 %v238
  %v278 = vunpack.c.l.b16 %v239
  %v279 = vunpack.c.l.b16 %v240
  %v280 = vpack.c.b16 %v265, %v264
  %v281 = vpack.c.b16 %v267, %v266
  %v282 = vpack.c.b16 %v269, %v268
  %v283 = vpack.c.b16 %v271, %v270
  %v284 = vpack.c.b16 %v273, %v272
  %v285 = vpack.c.b16 %v275, %v274
  %v286 = vpack.c.b16 %v277, %v276
  %v287 = vpack.c.b16 %v279, %v278
  %296 = vmatprep.subr.bf16.mxu0 0
  %297 = vmatpush1.bf16.msra.mxu0 %v287
  %298 = vmatprep.subr.bf16.mxu0 0
  %299 = vmatpush1.bf16.msra.mxu0 %v286
  %300 = vmatprep.subr.bf16.mxu0 0
  %301 = vmatpush1.bf16.msra.mxu0 %v285
  %302 = vmatprep.subr.bf16.mxu0 0
  %303 = vmatpush1.bf16.msra.mxu0 %v284
  %304 = vmatprep.subr.bf16.mxu0 0
  %305 = vmatpush1.bf16.msra.mxu0 %v283
  %306 = vmatprep.subr.bf16.mxu0 0
  %307 = vmatpush1.bf16.msra.mxu0 %v282
  %308 = vmatprep.subr.bf16.mxu0 0
  %309 = vmatpush1.bf16.msra.mxu0 %v281
  %310 = vmatprep.subr.bf16.mxu0 0
  %311 = vmatpush1.bf16.msra.mxu0 %v280
  %312 = vmatprep.subr.bf16.mxu0 0
  %313 = vmatpush2.bf16.msra.mxu0 0
  %314 = vmatprep.subr.bf16.mxu0 0
  %315 = vmatpush2.bf16.msra.mxu0 0
  %316 = vmatprep.subr.bf16.mxu0 0
  %317 = vmatpush2.bf16.msra.mxu0 0
  %318 = vmatprep.subr.bf16.mxu0 0
  %319 = vmatpush2.bf16.msra.mxu0 0
  %320 = vmatprep.subr.bf16.mxu0 0
  %321 = vmatpush2.bf16.msra.mxu0 0
  %322 = vmatprep.subr.bf16.mxu0 0
  %323 = vmatpush2.bf16.msra.mxu0 0
  %324 = vmatprep.subr.bf16.mxu0 0
  %325 = vmatpush2.bf16.msra.mxu0 0
  %326 = vmatprep.subr.bf16.mxu0 0
  %327 = vmatpush2.bf16.msra.mxu0 0
  %328 = vmatprep.mubr.bf16.mxu0 0
  %329 = vmatmul.mubr.bf16.gmra.mxu0 %v221
  %v330 = vpop.f32.mrf.mxu0
  %v331 = vadd.f32 %v246, %v330
  %v332 = vpop.f32.mrf.mxu0
  %v333 = vpop.f32.mrf.mxu0
  %v334 = vadd.f32 %v246, %v333
  %v335 = vpop.f32.mrf.mxu0
  %336 = vmatprep.mubr.bf16.mxu0 0
  %337 = vmatmul.mubr.bf16.gmra.mxu0 %v222
  %v338 = vpop.f32.mrf.mxu0
  %v339 = vadd.f32 %v246, %v338
  %v340 = vpop.f32.mrf.mxu0
  %v341 = vpop.f32.mrf.mxu0
  %v342 = vadd.f32 %v246, %v341
  %v343 = vpop.f32.mrf.mxu0
  %344 = vmatprep.mubr.bf16.mxu0 0
  %345 = vmatmul.mubr.bf16.gmra.mxu0 %v223
  %v346 = vpop.f32.mrf.mxu0
  %v347 = vadd.f32 %v246, %v346
  %v348 = vpop.f32.mrf.mxu0
  %v349 = vpop.f32.mrf.mxu0
  %v350 = vadd.f32 %v246, %v349
  %v351 = vpop.f32.mrf.mxu0
  %352 = vmatprep.mubr.bf16.mxu0 0
  %353 = vmatmul.mubr.bf16.gmra.mxu0 %v224
  %v354 = vpop.f32.mrf.mxu0
  %v355 = vadd.f32 %v246, %v354
  %v356 = vpop.f32.mrf.mxu0
  %v357 = vpop.f32.mrf.mxu0
  %v358 = vadd.f32 %v246, %v357
  %v359 = vpop.f32.mrf.mxu0
  %360 = vdwg.mxu0
  %v361 = vld [vmem:[%s6] sm:$0xf]
  %v362 = vld [vmem:[%s6 + $0x4] sm:$0xf]
  %v363 = vld [vmem:[%s6 + $0x8] sm:$0xf]
  %v364 = vld [vmem:[%s6 + $0xc] sm:$0xf]
  %v365 = vld [vmem:[%s6 + $0x10] sm:$0xf]
  %v366 = vld [vmem:[%s6 + $0x14] sm:$0xf]
  %v367 = vld [vmem:[%s6 + $0x18] sm:$0xf]
  %v368 = vld [vmem:[%s6 + $0x1c] sm:$0xf]
  %v369 = vld [vmem:[%s6 + $0x20] sm:$0xf]
  %v370 = vld [vmem:[%s6 + $0x24] sm:$0xf]
  %v371 = vld [vmem:[%s6 + $0x28] sm:$0xf]
  %v372 = vld [vmem:[%s6 + $0x2c] sm:$0xf]
  %v373 = vld [vmem:[%s6 + $0x30] sm:$0xf]
  %v374 = vld [vmem:[%s6 + $0x34] sm:$0xf]
  %v375 = vld [vmem:[%s6 + $0x38] sm:$0xf]
  %v376 = vld [vmem:[%s6 + $0x3c] sm:$0xf]
  %v377 = vld [vmem:[%s7] sm:$0x1]
  %v379 = vlaneseq
  %v380 = vshrl.u32 %v379, 7
  %v381 = vsub.s32 0, %v380
  %v382 = vrot.slane %v377, %v381
  %v400 = vunpack.c.l.b16 %v361
  %v401 = vunpack.c.l.b16 %v362
  %v402 = vunpack.c.l.b16 %v363
  %v403 = vunpack.c.l.b16 %v364
  %v404 = vunpack.c.l.b16 %v365
  %v405 = vunpack.c.l.b16 %v366
  %v406 = vunpack.c.l.b16 %v367
  %v407 = vunpack.c.l.b16 %v368
  %v408 = vunpack.c.l.b16 %v369
  %v409 = vunpack.c.l.b16 %v370
  %v410 = vunpack.c.l.b16 %v371
  %v411 = vunpack.c.l.b16 %v372
  %v412 = vunpack.c.l.b16 %v373
  %v413 = vunpack.c.l.b16 %v374
  %v414 = vunpack.c.l.b16 %v375
  %v415 = vunpack.c.l.b16 %v376
  %v416 = vpack.c.b16 %v401, %v400
  %v417 = vpack.c.b16 %v403, %v402
  %v418 = vpack.c.b16 %v405, %v404
  %v419 = vpack.c.b16 %v407, %v406
  %v420 = vpack.c.b16 %v409, %v408
  %v421 = vpack.c.b16 %v411, %v410
  %v422 = vpack.c.b16 %v413, %v412
  %v423 = vpack.c.b16 %v415, %v414
  %432 = vmatprep.subr.bf16.mxu0 0
  %433 = vmatpush1.bf16.msra.mxu0 %v423
  %434 = vmatprep.subr.bf16.mxu0 0
  %435 = vmatpush1.bf16.msra.mxu0 %v422
  %436 = vmatprep.subr.bf16.mxu0 0
  %437 = vmatpush1.bf16.msra.mxu0 %v421
  %438 = vmatprep.subr.bf16.mxu0 0
  %439 = vmatpush1.bf16.msra.mxu0 %v420
  %440 = vmatprep.subr.bf16.mxu0 0
  %441 = vmatpush1.bf16.msra.mxu0 %v419
  %442 = vmatprep.subr.bf16.mxu0 0
  %443 = vmatpush1.bf16.msra.mxu0 %v418
  %444 = vmatprep.subr.bf16.mxu0 0
  %445 = vmatpush1.bf16.msra.mxu0 %v417
  %446 = vmatprep.subr.bf16.mxu0 0
  %447 = vmatpush1.bf16.msra.mxu0 %v416
  %448 = vmatprep.subr.bf16.mxu0 0
  %449 = vmatpush2.bf16.msra.mxu0 0
  %450 = vmatprep.subr.bf16.mxu0 0
  %451 = vmatpush2.bf16.msra.mxu0 0
  %452 = vmatprep.subr.bf16.mxu0 0
  %453 = vmatpush2.bf16.msra.mxu0 0
  %454 = vmatprep.subr.bf16.mxu0 0
  %455 = vmatpush2.bf16.msra.mxu0 0
  %456 = vmatprep.subr.bf16.mxu0 0
  %457 = vmatpush2.bf16.msra.mxu0 0
  %458 = vmatprep.subr.bf16.mxu0 0
  %459 = vmatpush2.bf16.msra.mxu0 0
  %460 = vmatprep.subr.bf16.mxu0 0
  %461 = vmatpush2.bf16.msra.mxu0 0
  %462 = vmatprep.subr.bf16.mxu0 0
  %463 = vmatpush2.bf16.msra.mxu0 0
  %464 = vmatprep.mubr.bf16.mxu0 0
  %465 = vmatmul.mubr.bf16.gmra.mxu0 %v221
  %v466 = vpop.f32.mrf.mxu0
  %v467 = vadd.f32 %v382, %v466
  %v468 = vpop.f32.mrf.mxu0
  %v469 = vpop.f32.mrf.mxu0
  %v470 = vadd.f32 %v382, %v469
  %v471 = vpop.f32.mrf.mxu0
  %472 = vmatprep.mubr.bf16.mxu0 0
  %473 = vmatmul.mubr.bf16.gmra.mxu0 %v222
  %v474 = vpop.f32.mrf.mxu0
  %v475 = vadd.f32 %v382, %v474
  %v476 = vpop.f32.mrf.mxu0
  %v477 = vpop.f32.mrf.mxu0
  %v478 = vadd.f32 %v382, %v477
  %v479 = vpop.f32.mrf.mxu0
  %480 = vmatprep.mubr.bf16.mxu0 0
  %481 = vmatmul.mubr.bf16.gmra.mxu0 %v223
  %v482 = vpop.f32.mrf.mxu0
  %v483 = vadd.f32 %v382, %v482
  %v484 = vpop.f32.mrf.mxu0
  %v485 = vpop.f32.mrf.mxu0
  %v486 = vadd.f32 %v382, %v485
  %v487 = vpop.f32.mrf.mxu0
  %488 = vmatprep.mubr.bf16.mxu0 0
  %489 = vmatmul.mubr.bf16.gmra.mxu0 %v224
  %v490 = vpop.f32.mrf.mxu0
  %v491 = vadd.f32 %v382, %v490
  %v492 = vpop.f32.mrf.mxu0
  %v493 = vpop.f32.mrf.mxu0
  %v494 = vadd.f32 %v382, %v493
  %v495 = vpop.f32.mrf.mxu0
  %496 = vdwg.mxu0
  %v497 = vld [vmem:[%s1] sm:$0xff]
  %v498 = vld [vmem:[%s1 + $0x8] sm:$0xff]
  %v499 = vld [vmem:[%s1 + $0x10] sm:$0xff]
  %v500 = vld [vmem:[%s1 + $0x18] sm:$0xff]
  %v501 = vld [vmem:[%s1 + $0x20] sm:$0xff]
  %v502 = vld [vmem:[%s1 + $0x28] sm:$0xff]
  %v503 = vld [vmem:[%s1 + $0x30] sm:$0xff]
  %v504 = vld [vmem:[%s1 + $0x38] sm:$0xff]
  %v505 = vmul.f32 %v467, 0.5
  %v506 = vmul.f32 %v470, 0.5
  %v507 = vmul.f32 %v475, 0.5
  %v508 = vmul.f32 %v478, 0.5
  %v509 = vmul.f32 %v483, 0.5
  %v510 = vmul.f32 %v486, 0.5
  %v511 = vmul.f32 %v491, 0.5
  %v512 = vmul.f32 %v494, 0.5
  %v513 = vmul.f32 %v505, 1.442695
  %v514 = vpow.pop %v513
  %v515 = vmul.f32 %v506, 1.442695
  %v516 = vpow.pop %v515
  %v517 = vmul.f32 %v507, 1.442695
  %v518 = vpow.pop %v517
  %v519 = vmul.f32 %v508, 1.442695
  %v520 = vpow.pop %v519
  %v521 = vmul.f32 %v509, 1.442695
  %v522 = vpow.pop %v521
  %v523 = vmul.f32 %v510, 1.442695
  %v524 = vpow.pop %v523
  %v525 = vmul.f32 %v511, 1.442695
  %v526 = vpow.pop %v525
  %v527 = vmul.f32 %v512, 1.442695
  %v528 = vpow.pop %v527
  %v529 = vmul.f32 %v497, %v514
  %v530 = vmul.f32 %v498, %v516
  %v531 = vmul.f32 %v499, %v518
  %v532 = vmul.f32 %v500, %v520
  %v533 = vmul.f32 %v501, %v522
  %v534 = vmul.f32 %v502, %v524
  %v535 = vmul.f32 %v503, %v526
  %v536 = vmul.f32 %v504, %v528
  %v537 = vadd.f32 %v331, %v529
  %v538 = vadd.f32 %v334, %v530
  %v539 = vadd.f32 %v339, %v531
  %v540 = vadd.f32 %v342, %v532
  %v541 = vadd.f32 %v347, %v533
  %v542 = vadd.f32 %v350, %v534
  %v543 = vadd.f32 %v355, %v535
  %v544 = vadd.f32 %v358, %v536
  %v545 = vpack.c.bf16 %v538, %v537
  %v546 = vpack.c.bf16 %v540, %v539
  %v547 = vpack.c.bf16 %v542, %v541
  %v548 = vpack.c.bf16 %v544, %v543
  %v549 = vld [vmem:[%s8] sm:$0xf]
  %v550 = vld [vmem:[%s8 + $0x4] sm:$0xf]
  %v551 = vld [vmem:[%s8 + $0x8] sm:$0xf]
  %v552 = vld [vmem:[%s8 + $0xc] sm:$0xf]
  %v553 = vld [vmem:[%s8 + $0x10] sm:$0xf]
  %v554 = vld [vmem:[%s8 + $0x14] sm:$0xf]
  %v555 = vld [vmem:[%s8 + $0x18] sm:$0xf]
  %v556 = vld [vmem:[%s8 + $0x1c] sm:$0xf]
  %v557 = vld [vmem:[%s8 + $0x20] sm:$0xf]
  %v558 = vld [vmem:[%s8 + $0x24] sm:$0xf]
  %v559 = vld [vmem:[%s8 + $0x28] sm:$0xf]
  %v560 = vld [vmem:[%s8 + $0x2c] sm:$0xf]
  %v561 = vld [vmem:[%s8 + $0x30] sm:$0xf]
  %v562 = vld [vmem:[%s8 + $0x34] sm:$0xf]
  %v563 = vld [vmem:[%s8 + $0x38] sm:$0xf]
  %v564 = vld [vmem:[%s8 + $0x3c] sm:$0xf]
  %v565 = vld [vmem:[%s9] sm:$0x1]
  %v567 = vlaneseq
  %v568 = vshrl.u32 %v567, 7
  %v569 = vsub.s32 0, %v568
  %v570 = vrot.slane %v565, %v569
  %v588 = vunpack.c.l.b16 %v549
  %v589 = vunpack.c.l.b16 %v550
  %v590 = vunpack.c.l.b16 %v551
  %v591 = vunpack.c.l.b16 %v552
  %v592 = vunpack.c.l.b16 %v553
  %v593 = vunpack.c.l.b16 %v554
  %v594 = vunpack.c.l.b16 %v555
  %v595 = vunpack.c.l.b16 %v556
  %v596 = vunpack.c.l.b16 %v557
  %v597 = vunpack.c.l.b16 %v558
  %v598 = vunpack.c.l.b16 %v559
  %v599 = vunpack.c.l.b16 %v560
  %v600 = vunpack.c.l.b16 %v561
  %v601 = vunpack.c.l.b16 %v562
  %v602 = vunpack.c.l.b16 %v563
  %v603 = vunpack.c.l.b16 %v564
  %v604 = vpack.c.b16 %v589, %v588
  %v605 = vpack.c.b16 %v591, %v590
  %v606 = vpack.c.b16 %v593, %v592
  %v607 = vpack.c.b16 %v595, %v594
  %v608 = vpack.c.b16 %v597, %v596
  %v609 = vpack.c.b16 %v599, %v598
  %v610 = vpack.c.b16 %v601, %v600
  %v611 = vpack.c.b16 %v603, %v602
  %620 = vmatprep.subr.bf16.mxu0 0
  %621 = vmatpush1.bf16.msra.mxu0 %v611
  %622 = vmatprep.subr.bf16.mxu0 0
  %623 = vmatpush1.bf16.msra.mxu0 %v610
  %624 = vmatprep.subr.bf16.mxu0 0
  %625 = vmatpush1.bf16.msra.mxu0 %v609
  %626 = vmatprep.subr.bf16.mxu0 0
  %627 = vmatpush1.bf16.msra.mxu0 %v608
  %628 = vmatprep.subr.bf16.mxu0 0
  %629 = vmatpush1.bf16.msra.mxu0 %v607
  %630 = vmatprep.subr.bf16.mxu0 0
  %631 = vmatpush1.bf16.msra.mxu0 %v606
  %632 = vmatprep.subr.bf16.mxu0 0
  %633 = vmatpush1.bf16.msra.mxu0 %v605
  %634 = vmatprep.subr.bf16.mxu0 0
  %635 = vmatpush1.bf16.msra.mxu0 %v604
  %636 = vmatprep.subr.bf16.mxu0 0
  %637 = vmatpush2.bf16.msra.mxu0 0
  %638 = vmatprep.subr.bf16.mxu0 0
  %639 = vmatpush2.bf16.msra.mxu0 0
  %640 = vmatprep.subr.bf16.mxu0 0
  %641 = vmatpush2.bf16.msra.mxu0 0
  %642 = vmatprep.subr.bf16.mxu0 0
  %643 = vmatpush2.bf16.msra.mxu0 0
  %644 = vmatprep.subr.bf16.mxu0 0
  %645 = vmatpush2.bf16.msra.mxu0 0
  %646 = vmatprep.subr.bf16.mxu0 0
  %647 = vmatpush2.bf16.msra.mxu0 0
  %648 = vmatprep.subr.bf16.mxu0 0
  %649 = vmatpush2.bf16.msra.mxu0 0
  %650 = vmatprep.subr.bf16.mxu0 0
  %651 = vmatpush2.bf16.msra.mxu0 0
  %652 = vmatprep.mubr.bf16.mxu0 0
  %653 = vmatmul.mubr.bf16.gmra.mxu0 %v545
  %v654 = vpop.f32.mrf.mxu0
  %v655 = vadd.f32 %v570, %v654
  %v656 = vpop.f32.mrf.mxu0
  %v657 = vpop.f32.mrf.mxu0
  %v658 = vadd.f32 %v570, %v657
  %v659 = vpop.f32.mrf.mxu0
  %660 = vmatprep.mubr.bf16.mxu0 0
  %661 = vmatmul.mubr.bf16.gmra.mxu0 %v546
  %v662 = vpop.f32.mrf.mxu0
  %v663 = vadd.f32 %v570, %v662
  %v664 = vpop.f32.mrf.mxu0
  %v665 = vpop.f32.mrf.mxu0
  %v666 = vadd.f32 %v570, %v665
  %v667 = vpop.f32.mrf.mxu0
  %668 = vmatprep.mubr.bf16.mxu0 0
  %669 = vmatmul.mubr.bf16.gmra.mxu0 %v547
  %v670 = vpop.f32.mrf.mxu0
  %v671 = vadd.f32 %v570, %v670
  %v672 = vpop.f32.mrf.mxu0
  %v673 = vpop.f32.mrf.mxu0
  %v674 = vadd.f32 %v570, %v673
  %v675 = vpop.f32.mrf.mxu0
  %676 = vmatprep.mubr.bf16.mxu0 0
  %677 = vmatmul.mubr.bf16.gmra.mxu0 %v548
  %v678 = vpop.f32.mrf.mxu0
  %v679 = vadd.f32 %v570, %v678
  %v680 = vpop.f32.mrf.mxu0
  %v681 = vpop.f32.mrf.mxu0
  %v682 = vadd.f32 %v570, %v681
  %v683 = vpop.f32.mrf.mxu0
  %684 = vdwg.mxu0
  %v685 = vmax.f32 %v655, 0.0
  %v686 = vmax.f32 %v658, 0.0
  %v687 = vmax.f32 %v663, 0.0
  %v688 = vmax.f32 %v666, 0.0
  %v689 = vmax.f32 %v671, 0.0
  %v690 = vmax.f32 %v674, 0.0
  %v691 = vmax.f32 %v679, 0.0
  %v692 = vmax.f32 %v682, 0.0
  %v693 = vpack.c.bf16 %v686, %v685
  %v694 = vpack.c.bf16 %v688, %v687
  %v695 = vpack.c.bf16 %v690, %v689
  %v696 = vpack.c.bf16 %v692, %v691
  %v697 = vld [vmem:[%s10] sm:$0xf]
  %v698 = vld [vmem:[%s10 + $0x4] sm:$0xf]
  %v699 = vld [vmem:[%s10 + $0x8] sm:$0xf]
  %v700 = vld [vmem:[%s10 + $0xc] sm:$0xf]
  %v701 = vld [vmem:[%s10 + $0x10] sm:$0xf]
  %v702 = vld [vmem:[%s10 + $0x14] sm:$0xf]
  %v703 = vld [vmem:[%s10 + $0x18] sm:$0xf]
  %v704 = vld [vmem:[%s10 + $0x1c] sm:$0xf]
  %v705 = vld [vmem:[%s10 + $0x20] sm:$0xf]
  %v706 = vld [vmem:[%s10 + $0x24] sm:$0xf]
  %v707 = vld [vmem:[%s10 + $0x28] sm:$0xf]
  %v708 = vld [vmem:[%s10 + $0x2c] sm:$0xf]
  %v709 = vld [vmem:[%s10 + $0x30] sm:$0xf]
  %v710 = vld [vmem:[%s10 + $0x34] sm:$0xf]
  %v711 = vld [vmem:[%s10 + $0x38] sm:$0xf]
  %v712 = vld [vmem:[%s10 + $0x3c] sm:$0xf]
  %v713 = vld [vmem:[%s11] sm:$0x1]
  %v715 = vlaneseq
  %v716 = vshrl.u32 %v715, 7
  %v717 = vsub.s32 0, %v716
  %v718 = vrot.slane %v713, %v717
  %v736 = vunpack.c.l.b16 %v697
  %v737 = vunpack.c.l.b16 %v698
  %v738 = vunpack.c.l.b16 %v699
  %v739 = vunpack.c.l.b16 %v700
  %v740 = vunpack.c.l.b16 %v701
  %v741 = vunpack.c.l.b16 %v702
  %v742 = vunpack.c.l.b16 %v703
  %v743 = vunpack.c.l.b16 %v704
  %v744 = vunpack.c.l.b16 %v705
  %v745 = vunpack.c.l.b16 %v706
  %v746 = vunpack.c.l.b16 %v707
  %v747 = vunpack.c.l.b16 %v708
  %v748 = vunpack.c.l.b16 %v709
  %v749 = vunpack.c.l.b16 %v710
  %v750 = vunpack.c.l.b16 %v711
  %v751 = vunpack.c.l.b16 %v712
  %v752 = vpack.c.b16 %v737, %v736
  %v753 = vpack.c.b16 %v739, %v738
  %v754 = vpack.c.b16 %v741, %v740
  %v755 = vpack.c.b16 %v743, %v742
  %v756 = vpack.c.b16 %v745, %v744
  %v757 = vpack.c.b16 %v747, %v746
  %v758 = vpack.c.b16 %v749, %v748
  %v759 = vpack.c.b16 %v751, %v750
  %768 = vmatprep.subr.bf16.mxu0 0
  %769 = vmatpush1.bf16.msra.mxu0 %v759
  %770 = vmatprep.subr.bf16.mxu0 0
  %771 = vmatpush1.bf16.msra.mxu0 %v758
  %772 = vmatprep.subr.bf16.mxu0 0
  %773 = vmatpush1.bf16.msra.mxu0 %v757
  %774 = vmatprep.subr.bf16.mxu0 0
  %775 = vmatpush1.bf16.msra.mxu0 %v756
  %776 = vmatprep.subr.bf16.mxu0 0
  %777 = vmatpush1.bf16.msra.mxu0 %v755
  %778 = vmatprep.subr.bf16.mxu0 0
  %779 = vmatpush1.bf16.msra.mxu0 %v754
  %780 = vmatprep.subr.bf16.mxu0 0
  %781 = vmatpush1.bf16.msra.mxu0 %v753
  %782 = vmatprep.subr.bf16.mxu0 0
  %783 = vmatpush1.bf16.msra.mxu0 %v752
  %784 = vmatprep.subr.bf16.mxu0 0
  %785 = vmatpush2.bf16.msra.mxu0 0
  %786 = vmatprep.subr.bf16.mxu0 0
  %787 = vmatpush2.bf16.msra.mxu0 0
  %788 = vmatprep.subr.bf16.mxu0 0
  %789 = vmatpush2.bf16.msra.mxu0 0
  %790 = vmatprep.subr.bf16.mxu0 0
  %791 = vmatpush2.bf16.msra.mxu0 0
  %792 = vmatprep.subr.bf16.mxu0 0
  %793 = vmatpush2.bf16.msra.mxu0 0
  %794 = vmatprep.subr.bf16.mxu0 0
  %795 = vmatpush2.bf16.msra.mxu0 0
  %796 = vmatprep.subr.bf16.mxu0 0
  %797 = vmatpush2.bf16.msra.mxu0 0
  %798 = vmatprep.subr.bf16.mxu0 0
  %799 = vmatpush2.bf16.msra.mxu0 0
  %800 = vmatprep.mubr.bf16.mxu0 0
  %801 = vmatmul.mubr.bf16.gmra.mxu0 %v693
  %v802 = vpop.f32.mrf.mxu0
  %v803 = vadd.f32 %v718, %v802
  %v804 = vpop.f32.mrf.mxu0
  %v805 = vpop.f32.mrf.mxu0
  %v806 = vadd.f32 %v718, %v805
  %v807 = vpop.f32.mrf.mxu0
  %808 = vmatprep.mubr.bf16.mxu0 0
  %809 = vmatmul.mubr.bf16.gmra.mxu0 %v694
  %v810 = vpop.f32.mrf.mxu0
  %v811 = vadd.f32 %v718, %v810
  %v812 = vpop.f32.mrf.mxu0
  %v813 = vpop.f32.mrf.mxu0
  %v814 = vadd.f32 %v718, %v813
  %v815 = vpop.f32.mrf.mxu0
  %816 = vmatprep.mubr.bf16.mxu0 0
  %817 = vmatmul.mubr.bf16.gmra.mxu0 %v695
  %v818 = vpop.f32.mrf.mxu0
  %v819 = vadd.f32 %v718, %v818
  %v820 = vpop.f32.mrf.mxu0
  %v821 = vpop.f32.mrf.mxu0
  %v822 = vadd.f32 %v718, %v821
  %v823 = vpop.f32.mrf.mxu0
  %824 = vmatprep.mubr.bf16.mxu0 0
  %825 = vmatmul.mubr.bf16.gmra.mxu0 %v696
  %v826 = vpop.f32.mrf.mxu0
  %v827 = vadd.f32 %v718, %v826
  %v828 = vpop.f32.mrf.mxu0
  %v829 = vpop.f32.mrf.mxu0
  %v830 = vadd.f32 %v718, %v829
  %v831 = vpop.f32.mrf.mxu0
  %832 = vdwg.mxu0
  %833 = vst [vmem:[%s12] sm:$0xff] %v803
  %834 = vst [vmem:[%s12 + $0x8] sm:$0xff] %v806
  %835 = vst [vmem:[%s12 + $0x10] sm:$0xff] %v811
  %836 = vst [vmem:[%s12 + $0x18] sm:$0xff] %v814
  %837 = vst [vmem:[%s12 + $0x20] sm:$0xff] %v819
  %838 = vst [vmem:[%s12 + $0x28] sm:$0xff] %v822
  %839 = vst [vmem:[%s12 + $0x30] sm:$0xff] %v827
  %840 = vst [vmem:[%s12 + $0x38] sm:$0xff] %v830
  %841 = vst [vmem:[%s13] sm:$0xff] %v331
  %842 = vst [vmem:[%s13 + $0x8] sm:$0xff] %v334
  %843 = vst [vmem:[%s13 + $0x10] sm:$0xff] %v339
  %844 = vst [vmem:[%s13 + $0x18] sm:$0xff] %v342
  %845 = vst [vmem:[%s13 + $0x20] sm:$0xff] %v347
  %846 = vst [vmem:[%s13 + $0x28] sm:$0xff] %v350
  %847 = vst [vmem:[%s13 + $0x30] sm:$0xff] %v355
  %848 = vst [vmem:[%s13 + $0x38] sm:$0xff] %v358
  %849 = vst [vmem:[%s14] sm:$0xff] %v467
  %850 = vst [vmem:[%s14 + $0x8] sm:$0xff] %v470
  %851 = vst [vmem:[%s14 + $0x10] sm:$0xff] %v475
  %852 = vst [vmem:[%s14 + $0x18] sm:$0xff] %v478
  %853 = vst [vmem:[%s14 + $0x20] sm:$0xff] %v483
  %854 = vst [vmem:[%s14 + $0x28] sm:$0xff] %v486
  %855 = vst [vmem:[%s14 + $0x30] sm:$0xff] %v491
  %856 = vst [vmem:[%s14 + $0x38] sm:$0xff] %v494
  // Predicated region
  $region50: #{vae_forward.1} parent=0 // pred_check
    _
  $region51: #{vae_forward.1} parent=0 // pred_check_branch
    %858 = sbr.rel (0) target = $region53
  $region52: #{vae_forward.1} parent=0 // pred_region
    _
  $region53: #{vae_forward.1} parent=0 // pred_fallthru
    _
  // Predicated region
  $region54: #{vae_forward.1} parent=0 // pred_check
    _
  $region55: #{vae_forward.1} parent=0 // pred_check_branch
    %860 = sbr.rel (0) target = $region57
  $region56: #{vae_forward.1} parent=0 // pred_region
    _
  $region57: #{vae_forward.1} parent=0 // pred_fallthru
    _
  // Predicated region
  $region58: #{vae_forward.1} parent=0 // pred_check
    _
  $region59: #{vae_forward.1} parent=0 // pred_check_branch
    %862 = sbr.rel (0) target = $region61
  $region60: #{vae_forward.1} parent=0 // pred_region
    _
  $region61: #{vae_forward.1} parent=0 // pred_fallthru
    _
  // Predicated region
  $region62: #{vae_forward.1} parent=0 // pred_check
    _
  $region63: #{vae_forward.1} parent=0 // pred_check_branch
    %864 = sbr.rel (0) target = $region65
  $region64: #{vae_forward.1} parent=0 // pred_region
    _
  $region65: #{vae_forward.1} parent=0 // pred_fallthru
    _
  // Predicated region
  $region66: #{vae_forward.1} parent=0 // pred_check
    _
  $region67: #{vae_forward.1} parent=0 // pred_check_branch
    %866 = sbr.rel (0) target = $region69
  $region68: #{vae_forward.1} parent=0 // pred_region
    _
  $region69: #{vae_forward.1} parent=0 // pred_fallthru
    _
  // Predicated region
  $region70: #{vae_forward.1} parent=0 // pred_check
    _
  $region71: #{vae_forward.1} parent=0 // pred_check_branch
    %868 = sbr.rel (0) target = $region73
  $region72: #{vae_forward.1} parent=0 // pred_region
    _
  $region73: #{vae_forward.1} parent=0 // pred_fallthru
    _

</llo_original>
